<compile_context>
chip_gen: v5e
topology: v5e:2x2
jax: 0.10.0
libtpu: 0.0.40
codegen_flags: <defaults>
</compile_context>

<pallas_src>
import jax
import jax.numpy as jnp
from jax import lax
from jax.experimental import pallas as pl
from jax.experimental.pallas import tpu as pltpu


def _round_up(n, m):
    return ((n + m - 1) // m) * m


def critic_kernel(x_ref, a_ref, w1x_ref, w1a_ref, b1_ref,
                  w2_ref, b2_ref, w3r_ref, b3_ref, o_ref):
    # --- fc1 on cat([xn, a], -1) == x @ W1x' + a @ W1a + b1' ----------------
    # (normalization already folded into W1x'/b1' in the wrapper; the split
    #  matmul avoids materializing a concat in VMEM)
    h = (jnp.dot(x_ref[...], w1x_ref[...], preferred_element_type=jnp.float32)
         + jnp.dot(a_ref[...], w1a_ref[...], preferred_element_type=jnp.float32)
         + b1_ref[...])                                         # f32 (TB, H1)
    h = jnp.maximum(h, 0.0)

    # --- fc2 + ReLU ---------------------------------------------------------
    h2 = jnp.dot(h, w2_ref[...], preferred_element_type=jnp.float32) + b2_ref[...]
    h2 = jnp.maximum(h2, 0.0)                                   # f32 (TB, H2)

    # --- fc3 (out_features == 1) --------------------------------------------
    # Contract H2 with the batch kept on the output's lane axis:
    #   (1, H2) . (TB, H2)^T -> (1, TB)
    # so the store is full unmasked vst's rather than ~TB/8 masked 1-lane
    # stores of a (TB, 1) column.
    q = lax.dot_general(w3r_ref[...], h2, (((1,), (1,)), ((), ())),
                        preferred_element_type=jnp.float32) + b3_ref[0]
    o_ref[...] = q.astype(o_ref.dtype)                          # (1, TB)


def critic_forward(x, a, params, *, block_b=4096):
    """x: (B, nb_states), a: (B, nb_actions). Returns (B, 1) float32."""
    w1, b1, w2, b2, w3, b3 = params
    B, S = x.shape
    A = a.shape[1]
    H1 = w1.shape[1]
    H2 = w2.shape[1]

    xf = x.astype(jnp.float32)
    af = a.astype(jnp.float32)

    # ---- global batch stats in ONE pass over x (torch.std: ddof=1) ---------
    n = xf.size
    s1 = jnp.sum(xf)
    s2 = jnp.sum(xf * xf)
    mean = s1 / n
    var = (s2 - n * mean * mean) / (n - 1)
    inv_std = lax.rsqrt(var)

    # ---- fold (x - mean) * inv_std into fc1 (tiny O(S*H1) wrapper op) ------
    w1f = w1.astype(jnp.float32)
    w1x = w1f[:S]                                      # (S, H1)
    w1a = w1f[S:]                                      # (A, H1)
    w1x_f = inv_std * w1x                              # scaled weights
    b1_f = (b1.reshape(1, H1).astype(jnp.float32)
            - mean * inv_std * jnp.sum(w1x, axis=0, keepdims=True))
    w2f = w2.astype(jnp.float32)                       # (H1, H2)
    b2f = b2.reshape(1, H2).astype(jnp.float32)
    w3r = w3.reshape(1, H2).astype(jnp.float32)        # fc3 as a row vector
    b3s = jnp.asarray(b3, jnp.float32).reshape(1)      # SMEM scalar

    # ---- batch tiling: big tiles, >=2 (even) tiles for large B (v7x), ------
    # ---- ragged last block instead of jnp.pad ------------------------------
    if B <= 256:
        TB, nt = B, 1                      # full-extent block, no alignment needed
    else:
        nt = max(2, pl.cdiv(B, block_b))   # >=2 so v7x megacore can split the batch
        nt += nt % 2                       # even tile count
        TB = _round_up(pl.cdiv(B, nt), 128)
        nt = pl.cdiv(B, TB)                # last block may be ragged (don't-care rows)

    pinned = lambda shape: pl.BlockSpec(shape, lambda i: (0, 0))  # resident weights
    # (single-buffering the pinned blocks would save a few KiB of VMEM; skipped
    #  since weights are tiny and VMEM headroom is huge.)

    out = pl.pallas_call(
        critic_kernel,
        out_shape=jax.ShapeDtypeStruct((1, nt * TB), jnp.float32),
        grid=(nt,),
        in_specs=[
            pl.BlockSpec((TB, S), lambda i: (i, 0)),            # x tile (streamed)
            pl.BlockSpec((TB, A), lambda i: (i, 0)),            # a tile (streamed)
            pinned((S, H1)),                                    # W1x' (resident)
            pinned((A, H1)),                                    # W1a
            pinned((1, H1)),                                    # b1'
            pinned((H1, H2)),                                   # W2
            pinned((1, H2)),                                    # b2
            pinned((1, H2)),                                    # W3 row
            pl.BlockSpec(memory_space=pltpu.MemorySpace.SMEM),  # b3 scalar
        ],
        out_specs=pl.BlockSpec((1, TB), lambda i: (0, i)),      # lane-dense row
        compiler_params=pltpu.CompilerParams(
            dimension_semantics=("parallel",)),
    )(xf, af, w1x_f, w1a, b1_f, w2f, b2f, w3r, b3s)

    return out[0, :B].reshape(B, 1)


def init_params(key, nb_states, nb_actions, hidden1, hidden2):
    """PyTorch nn.Linear-style init; weights stored (in_features, out_features)."""
    def linear(k, fan_in, fan_out):
        kw, kb = jax.random.split(k)
        bound = 1.0 / jnp.sqrt(float(fan_in))
        w = jax.random.uniform(kw, (fan_in, fan_out), jnp.float32, -bound, bound)
        b = jax.random.uniform(kb, (1, fan_out), jnp.float32, -bound, bound)
        return w, b

    k1, k2, k3 = jax.random.split(key, 3)
    w1, b1 = linear(k1, nb_states + nb_actions, hidden1)
    w2, b2 = linear(k2, hidden1, hidden2)
    w3, b3 = linear(k3, hidden2, 1)
    return w1, b1, w2, b2, w3, b3


def critic_reference(x, a, params):
    """Pure-f32 reference with exact PyTorch forward semantics."""
    w1, b1, w2, b2, w3, b3 = params
    xf = x.astype(jnp.float32)
    mean = jnp.mean(xf)
    std = jnp.sqrt(jnp.sum((xf - mean) ** 2) / (xf.size - 1))   # torch.std: ddof=1
    xn = (xf - mean) / std
    h = jnp.maximum(jnp.concatenate([xn, a.astype(jnp.float32)], axis=-1) @ w1 + b1, 0.0)
    h2 = jnp.maximum(h @ w2 + b2, 0.0)
    return h2 @ w3 + b3


if __name__ == "__main__":
    nb_states, nb_actions = 16, 4
    hidden1, hidden2 = 64, 32

    key = jax.random.PRNGKey(0)
    kx, ka, kp = jax.random.split(key, 3)
    params = init_params(kp, nb_states, nb_actions, hidden1, hidden2)

    # Case 1: tiny batch -> single full-extent tile.
    B = 8
    x = jax.random.normal(kx, (B, nb_states), dtype=jnp.float32)
    a = jax.random.normal(ka, (B, nb_actions), dtype=jnp.float32)
    out = jax.block_until_ready(critic_forward(x, a, params))
    ref = critic_reference(x, a, params)
    assert out.shape == (B, 1)
    assert jnp.allclose(out, ref, atol=2e-3, rtol=1e-2), "mismatch vs reference (B=8)"

    # Case 2: two parallel tiles with a ragged last block (no padding copies),
    # lane-dense output store.
    B2 = 300
    x2 = jax.random.normal(jax.random.fold_in(kx, 1), (B2, nb_states), jnp.float32)
    a2 = jax.random.normal(jax.random.fold_in(ka, 1), (B2, nb_actions), jnp.float32)
    out2 = jax.block_until_ready(critic_forward(x2, a2, params))
    ref2 = critic_reference(x2, a2, params)
    assert out2.shape == (B2, 1)
    assert jnp.allclose(out2, ref2, atol=2e-3, rtol=1e-2), "mismatch vs reference (B=300)"

    # Case 3: many grid steps via a small block_b (exercises the pipeline).
    B3 = 600
    x3 = jax.random.normal(jax.random.fold_in(kx, 2), (B3, nb_states), jnp.float32)
    a3 = jax.random.normal(jax.random.fold_in(ka, 2), (B3, nb_actions), jnp.float32)
    out3 = jax.block_until_ready(critic_forward(x3, a3, params, block_b=128))
    ref3 = critic_reference(x3, a3, params)
    assert out3.shape == (B3, 1)
    assert jnp.allclose(out3, ref3, atol=2e-3, rtol=1e-2), "mismatch vs reference (B=600)"

    print("KERNEL_OK")
</pallas_src>

<mosaic_0001>
module attributes {stable_mosaic.version = 11 : i64} {
  func.func @critic_kernel(%arg0: i32, %arg1: memref<8x16xf32, #tpu.memory_space<vmem>>, %arg2: memref<8x4xf32, #tpu.memory_space<vmem>>, %arg3: memref<16x64xf32, #tpu.memory_space<vmem>>, %arg4: memref<4x64xf32, #tpu.memory_space<vmem>>, %arg5: memref<1x64xf32, #tpu.memory_space<vmem>>, %arg6: memref<64x32xf32, #tpu.memory_space<vmem>>, %arg7: memref<1x32xf32, #tpu.memory_space<vmem>>, %arg8: memref<1x32xf32, #tpu.memory_space<vmem>>, %arg9: memref<1xf32, #tpu.memory_space<smem>>, %arg10: memref<1x8xf32, #tpu.memory_space<vmem>>) attributes {dimension_semantics = [#tpu.dimension_semantics<parallel>], iteration_bounds = array<i64: 1>, scalar_prefetch = 0 : i64, scratch_operands = 0 : i64, tpu.core_type = #tpu.core_type<tc>, window_params = [{transform_indices = @transform_0, window_bounds = array<i64: 8, 16>}, {transform_indices = @transform_1, window_bounds = array<i64: 8, 4>}, {pipeline_mode = #tpu.pipeline_mode<synchronous>, transform_indices = @transform_2, window_bounds = array<i64: 16, 64>}, {pipeline_mode = #tpu.pipeline_mode<synchronous>, transform_indices = @transform_3, window_bounds = array<i64: 4, 64>}, {pipeline_mode = #tpu.pipeline_mode<synchronous>, transform_indices = @transform_4, window_bounds = array<i64: 1, 64>}, {pipeline_mode = #tpu.pipeline_mode<synchronous>, transform_indices = @transform_5, window_bounds = array<i64: 64, 32>}, {pipeline_mode = #tpu.pipeline_mode<synchronous>, transform_indices = @transform_6, window_bounds = array<i64: 1, 32>}, {pipeline_mode = #tpu.pipeline_mode<synchronous>, transform_indices = @transform_7, window_bounds = array<i64: 1, 32>}, {transform_indices = @transform_8, window_bounds = array<i64: 1>}, {transform_indices = @transform_9, window_bounds = array<i64: 1, 8>}]} {
    %c0 = arith.constant 0 : index
    %c0_0 = arith.constant 0 : index
    %0 = vector.load %arg1[%c0, %c0_0] : memref<8x16xf32, #tpu.memory_space<vmem>>, vector<8x16xf32>
    %c0_1 = arith.constant 0 : index
    %c0_2 = arith.constant 0 : index
    %1 = vector.load %arg3[%c0_1, %c0_2] : memref<16x64xf32, #tpu.memory_space<vmem>>, vector<16x64xf32>
    %cst = arith.constant dense<0.000000e+00> : vector<8x64xf32>
    %2 = tpu.matmul %0, %1, %cst {dimension_numbers = #tpu.dot_dimension_numbers<[1], [0], [0], [1], [0, 0, 1, 1], [], []>} : vector<8x16xf32>, vector<16x64xf32>, vector<8x64xf32> -> vector<8x64xf32>
    %c0_3 = arith.constant 0 : index
    %c0_4 = arith.constant 0 : index
    %3 = vector.load %arg2[%c0_3, %c0_4] : memref<8x4xf32, #tpu.memory_space<vmem>>, vector<8x4xf32>
    %c0_5 = arith.constant 0 : index
    %c0_6 = arith.constant 0 : index
    %4 = vector.load %arg4[%c0_5, %c0_6] : memref<4x64xf32, #tpu.memory_space<vmem>>, vector<4x64xf32>
    %cst_7 = arith.constant dense<0.000000e+00> : vector<8x64xf32>
    %5 = tpu.matmul %3, %4, %cst_7 {dimension_numbers = #tpu.dot_dimension_numbers<[1], [0], [0], [1], [0, 0, 1, 1], [], []>} : vector<8x4xf32>, vector<4x64xf32>, vector<8x64xf32> -> vector<8x64xf32>
    %6 = arith.addf %2, %5 : vector<8x64xf32>
    %c0_8 = arith.constant 0 : index
    %c0_9 = arith.constant 0 : index
    %7 = vector.load %arg5[%c0_8, %c0_9] : memref<1x64xf32, #tpu.memory_space<vmem>>, vector<1x64xf32>
    %8 = vector.broadcast %7 : vector<1x64xf32> to vector<8x64xf32>
    %9 = arith.addf %6, %8 : vector<8x64xf32>
    %cst_10 = arith.constant 0.000000e+00 : f32
    %10 = vector.broadcast %cst_10 : f32 to vector<8x64xf32>
    %11 = arith.maximumf %9, %10 : vector<8x64xf32>
    %c0_11 = arith.constant 0 : index
    %c0_12 = arith.constant 0 : index
    %12 = vector.load %arg6[%c0_11, %c0_12] : memref<64x32xf32, #tpu.memory_space<vmem>>, vector<64x32xf32>
    %cst_13 = arith.constant dense<0.000000e+00> : vector<8x32xf32>
    %13 = tpu.matmul %11, %12, %cst_13 {dimension_numbers = #tpu.dot_dimension_numbers<[1], [0], [0], [1], [0, 0, 1, 1], [], []>} : vector<8x64xf32>, vector<64x32xf32>, vector<8x32xf32> -> vector<8x32xf32>
    %c0_14 = arith.constant 0 : index
    %c0_15 = arith.constant 0 : index
    %14 = vector.load %arg7[%c0_14, %c0_15] : memref<1x32xf32, #tpu.memory_space<vmem>>, vector<1x32xf32>
    %15 = vector.broadcast %14 : vector<1x32xf32> to vector<8x32xf32>
    %16 = arith.addf %13, %15 : vector<8x32xf32>
    %cst_16 = arith.constant 0.000000e+00 : f32
    %17 = vector.broadcast %cst_16 : f32 to vector<8x32xf32>
    %18 = arith.maximumf %16, %17 : vector<8x32xf32>
    %c0_17 = arith.constant 0 : index
    %c0_18 = arith.constant 0 : index
    %19 = vector.load %arg8[%c0_17, %c0_18] : memref<1x32xf32, #tpu.memory_space<vmem>>, vector<1x32xf32>
    %cst_19 = arith.constant dense<0.000000e+00> : vector<1x8xf32>
    %20 = tpu.matmul %19, %18, %cst_19 {dimension_numbers = #tpu.dot_dimension_numbers<[1], [1], [0], [0], [0, 0, 1, 0], [], []>} : vector<1x32xf32>, vector<8x32xf32>, vector<1x8xf32> -> vector<1x8xf32>
    %c0_20 = arith.constant 0 : index
    %21 = memref.load %arg9[%c0_20] : memref<1xf32, #tpu.memory_space<smem>>
    %22 = vector.broadcast %21 : f32 to vector<1x8xf32>
    %23 = arith.addf %20, %22 : vector<1x8xf32>
    %c0_21 = arith.constant 0 : index
    %c0_22 = arith.constant 0 : index
    %24 = vector.load %arg10[%c0_21, %c0_22] : memref<1x8xf32, #tpu.memory_space<vmem>>, vector<1x8xf32>
    tpu.vector_store %arg10[%c0_21, %c0_22], %23 {strides = array<i32>} : memref<1x8xf32, #tpu.memory_space<vmem>>, vector<1x8xf32>,
    return
  }
  func.func @transform_0(%arg0: i32) -> (i32, i32) {
    %c0_i32 = arith.constant 0 : i32
    %c0_i32_0 = arith.constant 0 : i32
    return %arg0, %c0_i32 : i32, i32
  }
  func.func @transform_1(%arg0: i32) -> (i32, i32) {
    %c0_i32 = arith.constant 0 : i32
    %c0_i32_0 = arith.constant 0 : i32
    return %arg0, %c0_i32 : i32, i32
  }
  func.func @transform_2(%arg0: i32) -> (i32, i32) {
    %c0_i32 = arith.constant 0 : i32
    %c0_i32_0 = arith.constant 0 : i32
    %c0_i32_1 = arith.constant 0 : i32
    return %c0_i32, %c0_i32_0 : i32, i32
  }
  func.func @transform_3(%arg0: i32) -> (i32, i32) {
    %c0_i32 = arith.constant 0 : i32
    %c0_i32_0 = arith.constant 0 : i32
    %c0_i32_1 = arith.constant 0 : i32
    return %c0_i32, %c0_i32_0 : i32, i32
  }
  func.func @transform_4(%arg0: i32) -> (i32, i32) {
    %c0_i32 = arith.constant 0 : i32
    %c0_i32_0 = arith.constant 0 : i32
    %c0_i32_1 = arith.constant 0 : i32
    return %c0_i32, %c0_i32_0 : i32, i32
  }
  func.func @transform_5(%arg0: i32) -> (i32, i32) {
    %c0_i32 = arith.constant 0 : i32
    %c0_i32_0 = arith.constant 0 : i32
    %c0_i32_1 = arith.constant 0 : i32
    return %c0_i32, %c0_i32_0 : i32, i32
  }
  func.func @transform_6(%arg0: i32) -> (i32, i32) {
    %c0_i32 = arith.constant 0 : i32
    %c0_i32_0 = arith.constant 0 : i32
    %c0_i32_1 = arith.constant 0 : i32
    return %c0_i32, %c0_i32_0 : i32, i32
  }
  func.func @transform_7(%arg0: i32) -> (i32, i32) {
    %c0_i32 = arith.constant 0 : i32
    %c0_i32_0 = arith.constant 0 : i32
    %c0_i32_1 = arith.constant 0 : i32
    return %c0_i32, %c0_i32_0 : i32, i32
  }
  func.func @transform_8(%arg0: i32) -> i32 {
    %c0_i32 = arith.constant 0 : i32
    %c0_i32_0 = arith.constant 0 : i32
    return %c0_i32 : i32
  }
  func.func @transform_9(%arg0: i32) -> (i32, i32) {
    %c0_i32 = arith.constant 0 : i32
    %c0_i32_0 = arith.constant 0 : i32
    return %c0_i32, %arg0 : i32, i32
  }
}

</mosaic_0001>

<llo_original>
// kernel: tpu_custom_call.1
$region0: #{tpu_custom_call.1}
  #allocation0 [shape = 'u32[]', space=smem, size = 0x4, offset = 0x4, fixed_abs, tag = 'smem constant byte address 0x4 - core index']
  #allocation1 [shape = 'u32[72,128]{1,0:T(1,128)}', space=vmem, size = 0x9000, scoped, tag = 'internal scratch']
  #allocation2 [shape = 'f32[1]{0:T(128)S(6)}', space=smem, size = 0x200, scoped, tag = 'scoped memory for tpu_custom_call.1']
  %s0 = inlined_call_operand.vmem [shape: f32[8,16], index: 0, kind: input, shape index: {}]
  %s1 = inlined_call_operand.vmem [shape: f32[8,4], index: 1, kind: input, shape index: {}]
  %s2 = inlined_call_operand.vmem [shape: f32[16,64], index: 2, kind: input, shape index: {}]
  %s3 = inlined_call_operand.vmem [shape: f32[4,64], index: 3, kind: input, shape index: {}]
  %s4 = inlined_call_operand.vmem [shape: f32[1,64], index: 4, kind: input, shape index: {}]
  %s5 = inlined_call_operand.vmem [shape: f32[64,32], index: 5, kind: input, shape index: {}]
  %s6 = inlined_call_operand.vmem [shape: f32[1,32], index: 6, kind: input, shape index: {}]
  %s7 = inlined_call_operand.vmem [shape: f32[1,32], index: 7, kind: input, shape index: {}]
  %s8 = inlined_call_operand.<no memory space> [shape: f32[1], index: 8, kind: input, shape index: {}]
  %s9 = inlined_call_operand.hbm [shape: f32[1,8], index: 9, kind: output, shape index: {}]
  %s10 = sld [smem:[#allocation0]]
  $region46: #{tpu_custom_call.1} parent=0
    _
  %s12 = ssub.s32 1, %s10
  %s13 = scalar_select 0, %s12, %s10
  %14 = sst [smem:[#allocation2]] %s8
  $region1: #{tpu_custom_call.1} parent=0
    #allocation3 [shape = 'u8[512]{0}', space=vmem, size = 0x400, scoped, tag = 'output window, operand 0, single buffered']
    #allocation4 [shape = 's32[1]{0}', space=sflag, size = 0x4, scoped, tag = 'scoped memory for tpu_custom_call.1']
    %15 = vsyncpa [#allocation4], 0
    // Predicated region
    $region2: #{tpu_custom_call.1} parent=1 // pred_check
      _
    $region3: #{tpu_custom_call.1} parent=1 // pred_check_branch
      %17 = sbr.rel (0) target = $region5
    $region4: #{tpu_custom_call.1} parent=1 // pred_region
      _
    $region5: #{tpu_custom_call.1} parent=1 // pred_fallthru
      _
    // Predicated region
    $region6: #{tpu_custom_call.1} parent=1 // pred_check
      _
    $region7: #{tpu_custom_call.1} parent=1 // pred_check_branch
      %19 = sbr.rel (0) target = $region9
    $region8: #{tpu_custom_call.1} parent=1 // pred_region
      _
    $region9: #{tpu_custom_call.1} parent=1 // pred_fallthru
      _
    // Predicated region
    $region10: #{tpu_custom_call.1} parent=1 // pred_check
      _
    $region11: #{tpu_custom_call.1} parent=1 // pred_check_branch
      %21 = sbr.rel (0) target = $region13
    $region12: #{tpu_custom_call.1} parent=1 // pred_region
      _
    $region13: #{tpu_custom_call.1} parent=1 // pred_fallthru
      _
    // Predicated region
    $region14: #{tpu_custom_call.1} parent=1 // pred_check
      _
    $region15: #{tpu_custom_call.1} parent=1 // pred_check_branch
      %23 = sbr.rel (0) target = $region17
    $region16: #{tpu_custom_call.1} parent=1 // pred_region
      _
    $region17: #{tpu_custom_call.1} parent=1 // pred_fallthru
      _
    // Predicated region
    $region18: #{tpu_custom_call.1} parent=1 // pred_check
      _
    $region19: #{tpu_custom_call.1} parent=1 // pred_check_branch
      %25 = sbr.rel (0) target = $region21
    $region20: #{tpu_custom_call.1} parent=1 // pred_region
      _
    $region21: #{tpu_custom_call.1} parent=1 // pred_fallthru
      _
    // Predicated region
    $region22: #{tpu_custom_call.1} parent=1 // pred_check
      _
    $region23: #{tpu_custom_call.1} parent=1 // pred_check_branch
      %27 = sbr.rel (0) target = $region25
    $region24: #{tpu_custom_call.1} parent=1 // pred_region
      _
    $region25: #{tpu_custom_call.1} parent=1 // pred_fallthru
      _
    // Predicated region
    $region26: #{tpu_custom_call.1} parent=1 // pred_check
      _
    $region27: #{tpu_custom_call.1} parent=1 // pred_check_branch
      %29 = sbr.rel (0) target = $region29
    $region28: #{tpu_custom_call.1} parent=1 // pred_region
      _
    $region29: #{tpu_custom_call.1} parent=1 // pred_fallthru
      _
    // Predicated region
    $region30: #{tpu_custom_call.1} parent=1 // pred_check
      _
    $region31: #{tpu_custom_call.1} parent=1 // pred_check_branch
      %31 = sbr.rel (0) target = $region33
    $region32: #{tpu_custom_call.1} parent=1 // pred_region
      _
    $region33: #{tpu_custom_call.1} parent=1 // pred_fallthru
      _
    // Predicated region
    $region34: #{tpu_custom_call.1} parent=1 // pred_check
      _
    $region35: #{tpu_custom_call.1} parent=1 // pred_check_branch
      %33 = sbr.rel (0) target = $region37
    $region36: #{tpu_custom_call.1} parent=1 // pred_region
      _
    $region37: #{tpu_custom_call.1} parent=1 // pred_fallthru
      _
    %v34 = vld [vmem:[%s0] sm:$0xff]
    %v35 = vld [vmem:[%s2] sm:$0xff]
    %v36 = vld [vmem:[%s2 + $0x8] sm:$0xff]
    %v37 = vld [vmem:[%s1] sm:$0xff]
    %v38 = vld [vmem:[%s3] sm:$0xf]
    %vm39 = vcmask 31744
    %v41 = vsel %vm39, %v37, 0
    %vm43 = vcmask 1043456
    %v45 = vsel %vm43, %v38, 0
    %47 = vmatpush.msra.mxu0 0.0
    %48 = vmatpush.msra.mxu0 0.0
    %49 = vmatpush.msra.mxu0 0.0
    %50 = vmatpush.msra.mxu0 0.0
    %51 = vmatpush.msra.mxu0 0.0
    %52 = vmatpush.msra.mxu0 0.0
    %53 = vmatpush.msra.mxu0 0.0
    %54 = vmatpush.msra.mxu0 0.0
    %55 = vmatpush.msra.mxu0 0.0
    %56 = vmatpush.msra.mxu0 0.0
    %57 = vmatpush.msra.mxu0 0.0
    %58 = vmatpush.msra.mxu0 0.0
    %59 = vmatpush.msra.mxu0 0.0
    %60 = vmatpush.msra.mxu0 0.0
    %61 = vmatpush.msra.mxu0 0.0
    %62 = vmatpush.msra.mxu0 %v45
    %63 = vmatmul.f32.gmra.mxu0 %v41
    %v64 = vpop.f32.mrf.mxu0
    %v65 = vadd.f32 0.0, %v64
    %66 = vdwg.mxu0
    %vm67 = vcmask 130048
    %v69 = vsel %vm67, %v34, 0
    %71 = vmatpush.msra.mxu0 0.0
    %72 = vmatpush.msra.mxu0 0.0
    %73 = vmatpush.msra.mxu0 0.0
    %74 = vmatpush.msra.mxu0 0.0
    %75 = vmatpush.msra.mxu0 0.0
    %76 = vmatpush.msra.mxu0 0.0
    %77 = vmatpush.msra.mxu0 0.0
    %78 = vmatpush.msra.mxu0 0.0
    %79 = vmatpush.msra.mxu0 0.0
    %80 = vmatpush.msra.mxu0 0.0
    %81 = vmatpush.msra.mxu0 0.0
    %82 = vmatpush.msra.mxu0 0.0
    %83 = vmatpush.msra.mxu0 0.0
    %84 = vmatpush.msra.mxu0 0.0
    %85 = vmatpush.msra.mxu0 %v36
    %86 = vmatpush.msra.mxu0 %v35
    %87 = vmatmul.f32.gmra.mxu0 %v69
    %v88 = vpop.f32.mrf.mxu0
    %v89 = vadd.f32 %v65, %v88
    %90 = vdwg.mxu0
    %v91 = vld [vmem:[%s4] sm:$0x1]
    %v93 = vperm.slane %v91, 0
    %v95 = vadd.f32 %v89, %v93
    %v96 = vmax.f32 %v95, 0.0
    %v97 = vld [vmem:[%s5] sm:$0xff]
    %v98 = vld [vmem:[%s5 + $0x8] sm:$0xff]
    %v99 = vld [vmem:[%s5 + $0x10] sm:$0xff]
    %v100 = vld [vmem:[%s5 + $0x18] sm:$0xff]
    %v101 = vld [vmem:[%s5 + $0x20] sm:$0xff]
    %v102 = vld [vmem:[%s5 + $0x28] sm:$0xff]
    %v103 = vld [vmem:[%s5 + $0x30] sm:$0xff]
    %v104 = vld [vmem:[%s5 + $0x38] sm:$0xff]
    %v105 = vld [vmem:[%s6] sm:$0x1]
    %v107 = vperm.slane %v105, 0
    %vm109 = vcmask 523264
    %v111 = vsel %vm109, %v96, 0
    %113 = vmatpush.msra.mxu0 0.0
    %114 = vmatpush.msra.mxu0 0.0
    %115 = vmatpush.msra.mxu0 0.0
    %116 = vmatpush.msra.mxu0 0.0
    %117 = vmatpush.msra.mxu0 0.0
    %118 = vmatpush.msra.mxu0 0.0
    %119 = vmatpush.msra.mxu0 0.0
    %120 = vmatpush.msra.mxu0 0.0
    %121 = vmatpush.msra.mxu0 %v104
    %122 = vmatpush.msra.mxu0 %v103
    %123 = vmatpush.msra.mxu0 %v102
    %124 = vmatpush.msra.mxu0 %v101
    %125 = vmatpush.msra.mxu0 %v100
    %126 = vmatpush.msra.mxu0 %v99
    %127 = vmatpush.msra.mxu0 %v98
    %128 = vmatpush.msra.mxu0 %v97
    %129 = vmatmul.f32.gmra.mxu0 %v111
    %v130 = vpop.f32.mrf.mxu0
    %v131 = vadd.f32 %v107, %v130
    %132 = vdwg.mxu0
    %v133 = vmax.f32 %v131, 0.0
    %v134 = vld [vmem:[%s7] sm:$0x1]
    %s135 = sld [smem:[#allocation2]]
    %v136 = vstv %s135
    %vm137 = vcmask 261120
    %v139 = vsel %vm137, %v134, 0
    %v142 = vsel %vm137, %v133, 0
    %144 = vmatpush.xpose.msra.mxu0 0.0
    %145 = vmatpush.xpose.msra.mxu0 0.0
    %146 = vmatpush.xpose.msra.mxu0 0.0
    %147 = vmatpush.xpose.msra.mxu0 0.0
    %148 = vmatpush.xpose.msra.mxu0 0.0
    %149 = vmatpush.xpose.msra.mxu0 0.0
    %150 = vmatpush.xpose.msra.mxu0 0.0
    %151 = vmatpush.xpose.msra.mxu0 0.0
    %152 = vmatpush.xpose.msra.mxu0 0.0
    %153 = vmatpush.xpose.msra.mxu0 0.0
    %154 = vmatpush.xpose.msra.mxu0 0.0
    %155 = vmatpush.xpose.msra.mxu0 0.0
    %156 = vmatpush.xpose.msra.mxu0 0.0
    %157 = vmatpush.xpose.msra.mxu0 0.0
    %158 = vmatpush.xpose.msra.mxu0 0.0
    %159 = vmatpush.xpose.msra.mxu0 %v142
    %160 = vmatmul.f32.gmra.mxu0 %v139
    %v161 = vpop.f32.mrf.mxu0
    %v162 = vadd.f32 %v136, %v161
    %163 = vdwg.mxu0
    %vm164 = vcmask 57344
    %165 = vst.msk [vmem:[#allocation3] sm:$0x1] %vm164, %v162
    // Predicated region
    $region38: #{tpu_custom_call.1} parent=1 // pred_check
      _
    $region39: #{tpu_custom_call.1} parent=1 // pred_check_branch
      %167 = sbr.rel (0) target = $region41
    $region40: #{tpu_custom_call.1} parent=1 // pred_region
      %169 = vsyncadd [#allocation4], 0
      %s171 = sshll.u32 [#allocation3], 4
      %s172 = int_to_ptr.vmem [resolvable:$true] %s171
      %s173 = sshll.u32 %s9, 4
      %s174 = int_to_ptr.hbm [resolvable:$true] %s173
      %176 = dma.vmem_to_hbm [thread:$0]  %s172, 16, %s174, [#allocation4]
    $region41: #{tpu_custom_call.1} parent=1 // pred_fallthru
      _
    // Predicated region
    $region42: #{tpu_custom_call.1} parent=1 // pred_check
      _
    $region43: #{tpu_custom_call.1} parent=1 // pred_check_branch
      %178 = sbr.rel (0) target = $region45
    $region44: #{tpu_custom_call.1} parent=1 // pred_region
      %180 = dma.done [#allocation4], 16
    $region45: #{tpu_custom_call.1} parent=1 // pred_fallthru
      _
    %181 = vsyncpa [#allocation4], 1

</llo_original>
